<compile_context>
chip_gen: v7x
topology: tpu7x:2x2x1
jax: 0.10.0
libtpu: 0.0.40
codegen_flags: <defaults>
</compile_context>

<pallas_src>
import functools

import jax
import jax.numpy as jnp
from jax.experimental import pallas as pl
from jax.experimental.pallas import tpu as pltpu

LEAKY_SLOPE = 0.01   # nn.LeakyReLU() default
DROP_P = 0.5
LANE = 128
PACK = 16            # bf16 sublane packing (also a valid multiple of 8 for f32)


def _round_up(x, m):
    return (x + m - 1) // m * m


def _leaky_relu(x):
    return jnp.where(x > 0, x, LEAKY_SLOPE * x)


def _keep_mask(shape):
    """Fair p=0.5 keep mask from the hardware PRNG: one compare on the sign bit."""
    bits = pltpu.prng_random_bits(shape)
    if jnp.issubdtype(bits.dtype, jnp.signedinteger):
        return bits >= 0
    return bits < jnp.uint32(1 << 31)


def hne_kernel(seed_ref, x_ref, w1_ref, b1_ref, w2_ref, b2_ref, o_ref, *, training):
    """Per-batch-tile kernel: fc -> leaky -> dropout -> fc2 -> leaky -> dropout."""
    # In-kernel cast (f32 HBM tile -> compute dtype in vregs); no wrapper pad/cast pass.
    x = x_ref[...].astype(w1_ref.dtype)                              # (TB, In)

    # ---- fc + LeakyReLU (MXU matmul, f32 accumulate; elementwise in f32) ----
    h = jnp.dot(x, w1_ref[...], preferred_element_type=jnp.float32) + b1_ref[...]
    h = _leaky_relu(h)                                               # (TB, Hp) f32

    if training:
        # Distinct, non-overlapping stream per (seed, batch tile).
        pltpu.prng_seed(seed_ref[0] * pl.num_programs(0) + pl.program_id(0))
        # 1/(1-p) scale is already folded into w1/b1/w2/b2 by hne_prepare_params.
        h = jnp.where(_keep_mask(h.shape), h, 0.0)

    # ---- fc2 + LeakyReLU ----
    h = h.astype(w2_ref.dtype)                                       # bf16/f32 for MXU
    y = jnp.dot(h, w2_ref[...], preferred_element_type=jnp.float32) + b2_ref[...]
    y = _leaky_relu(y)                                               # (TB, Op) f32

    if training:
        y = jnp.where(_keep_mask(y.shape), y, 0.0)

    o_ref[...] = y.astype(o_ref.dtype)


def hne_prepare_params(w1, b1, w2, b2, *, compute_dtype=jnp.bfloat16, training=False):
    """One-time parameter prep (run once, outside the hot path).

    Pads the hidden/output feature dims up to lane multiples (zero pad is
    mathematically inert through LeakyReLU / dropout / fc2), casts weights to
    the MXU compute dtype, and -- in training mode -- folds the inverted-dropout
    1/(1-p) scale into both layers' weights/biases (exact in bf16: x2).
    """
    in_dim, hid_dim = w1.shape
    out_dim = w2.shape[1]
    assert b1.shape == (hid_dim,) and w2.shape == (hid_dim, out_dim) and b2.shape == (out_dim,)

    f32 = jnp.float32
    hp = _round_up(hid_dim, LANE)
    op = _round_up(out_dim, LANE)
    scale = (1.0 / (1.0 - DROP_P)) if training else 1.0

    w1p = jnp.zeros((in_dim, hp), compute_dtype).at[:, :hid_dim].set(
        (scale * w1.astype(f32)).astype(compute_dtype))
    b1p = jnp.zeros((1, hp), f32).at[0, :hid_dim].set(scale * b1.astype(f32))
    w2p = jnp.zeros((hp, op), compute_dtype).at[:hid_dim, :out_dim].set(
        (scale * w2.astype(f32)).astype(compute_dtype))
    b2p = jnp.zeros((1, op), f32).at[0, :out_dim].set(scale * b2.astype(f32))

    return {
        "w1": w1p, "b1": b1p, "w2": w2p, "b2": b2p,
        "dims": (in_dim, hid_dim, out_dim, hp, op),
        "training": training,
    }


def hne_forward(x, params, *, training=False, seed=0, block_b=512, out_dtype=None):
    """x: (B, input_dim) f32; params from hne_prepare_params.

    Returns (B, output_dim) in `out_dtype` (defaults to the compute dtype, i.e.
    bf16 on the fast path; pass out_dtype=jnp.float32 for an f32 result).
    """
    B, in_dim = x.shape
    w1p, b1p, w2p, b2p = params["w1"], params["b1"], params["w2"], params["b2"]
    in_dim_p, hid_dim, out_dim, hp, op = params["dims"]
    assert in_dim == in_dim_p, "x feature dim does not match prepared params"
    assert params["training"] == training, (
        "params were prepared for a different mode (dropout scale folding)")

    compute_dtype = w1p.dtype
    out_dtype = compute_dtype if out_dtype is None else out_dtype
    cb = jnp.dtype(compute_dtype).itemsize
    ob = jnp.dtype(out_dtype).itemsize

    # Batch tile: rounded to bf16 sublane packing; at least 2 grid steps when
    # B allows so v7x's second TensorCore gets work.  No batch padding of x --
    # Pallas masks the ragged last block (rows are independent, so garbage in
    # padded rows cannot contaminate valid outputs, and their writes are masked).
    tb_half = _round_up(-(-B // 2), PACK)
    tb = max(PACK, min(block_b, tb_half))
    grid = (pl.cdiv(B, tb),)

    seed_arr = jnp.asarray([seed], dtype=jnp.int32)

    # VMEM budget from the actual requested blocks: 2 buffers per input
    # (weights included -- they are still double-buffered by default), 2 output
    # buffers, plus f32 intermediates / RNG bits.  Capped at 48 MiB for v7x
    # headroom; raise on v5e/v6e if block_b grows well beyond 1024.
    weight_bytes = (in_dim * hp + hp * op) * cb + (hp + op) * 4
    io_bytes = 2 * tb * (in_dim * 4 + op * ob)
    scratch_bytes = 2 * tb * (hp + op) * 4
    footprint = 2 * weight_bytes + io_bytes + scratch_bytes
    vmem_limit = int(min(48 * 2**20, max(16 * 2**20, 2 * footprint)))

    cost = pl.CostEstimate(
        flops=2 * B * (in_dim * hp + hp * op),
        transcendentals=0,
        bytes_accessed=(B * in_dim * 4 + in_dim * hp * cb + hp * 4
                        + hp * op * cb + op * 4 + B * op * ob),
    )

    kernel = functools.partial(hne_kernel, training=training)

    out = pl.pallas_call(
        kernel,
        out_shape=jax.ShapeDtypeStruct((B, op), out_dtype),
        grid_spec=pltpu.PrefetchScalarGridSpec(
            num_scalar_prefetch=1,              # seed -> SMEM before the grid
            grid=grid,
            in_specs=[
                pl.BlockSpec((tb, in_dim), lambda i, s: (i, 0)),   # x tile (streamed)
                pl.BlockSpec((in_dim, hp), lambda i, s: (0, 0)),   # w1 resident
                pl.BlockSpec((1, hp),      lambda i, s: (0, 0)),   # b1 resident
                pl.BlockSpec((hp, op),     lambda i, s: (0, 0)),   # w2 resident
                pl.BlockSpec((1, op),      lambda i, s: (0, 0)),   # b2 resident
            ],
            out_specs=pl.BlockSpec((tb, op), lambda i, s: (i, 0)),
        ),
        compiler_params=pltpu.CompilerParams(
            dimension_semantics=("parallel",),   # batch tiles -> both v7x TCs
            vmem_limit_bytes=vmem_limit,
        ),
        cost_estimate=cost,
    )(seed_arr, x, w1p, b1p, w2p, b2p)

    # Only the padded feature columns are sliced off (output rows are exact).
    return out[:, :out_dim]


def hne_reference(x, w1, b1, w2, b2):
    """Pure-JAX reference (eval mode: dropout == identity)."""
    h = _leaky_relu(x @ w1 + b1)
    y = _leaky_relu(h @ w2 + b2)
    return y


if __name__ == "__main__":
    # Small shapes consistent with the module: args.hne_{input,hidden,output}_dim
    batch, input_dim, hidden_dim, output_dim = 8, 32, 64, 32

    key = jax.random.PRNGKey(0)
    kx, kw1, kb1, kw2, kb2 = jax.random.split(key, 5)

    x = jax.random.normal(kx, (batch, input_dim), dtype=jnp.float32)

    # Deterministic "PyTorch-style" init (uniform in +/- 1/sqrt(fan_in)); weights
    # stored pre-transposed as (in_features, out_features).
    bound1 = 1.0 / jnp.sqrt(input_dim)
    w1 = jax.random.uniform(kw1, (input_dim, hidden_dim), jnp.float32, -bound1, bound1)
    b1 = jax.random.uniform(kb1, (hidden_dim,), jnp.float32, -bound1, bound1)
    bound2 = 1.0 / jnp.sqrt(hidden_dim)
    w2 = jax.random.uniform(kw2, (hidden_dim, output_dim), jnp.float32, -bound2, bound2)
    b2 = jax.random.uniform(kb2, (output_dim,), jnp.float32, -bound2, bound2)

    ref = hne_reference(x, w1, b1, w2, b2)

    # Eval-mode, f32 matmul inputs: check vs the JAX reference (tolerance covers
    # TPU default-precision matmul differences between XLA and the MXU path).
    params_f32 = hne_prepare_params(w1, b1, w2, b2,
                                    compute_dtype=jnp.float32, training=False)
    out_f32 = jax.block_until_ready(
        hne_forward(x, params_f32, training=False, out_dtype=jnp.float32))
    assert out_f32.shape == (batch, output_dim)
    assert out_f32.dtype == jnp.float32
    assert jnp.allclose(out_f32, ref, atol=2e-2, rtol=2e-2), "f32 mismatch vs reference"

    # Eval-mode, bf16 matmul inputs + bf16 output (fast path): loose tolerance.
    params_bf16 = hne_prepare_params(w1, b1, w2, b2,
                                     compute_dtype=jnp.bfloat16, training=False)
    out_bf16 = jax.block_until_ready(hne_forward(x, params_bf16, training=False))
    assert out_bf16.shape == (batch, output_dim)
    assert jnp.allclose(out_bf16.astype(jnp.float32), ref, atol=6e-2, rtol=6e-2), \
        "bf16 mismatch vs reference"

    # Training mode uses the on-chip TPU PRNG (no CPU/interpret lowering for
    # prng_seed), so only exercise it when actually running on TPU hardware.
    # TODO(synk): torch's dropout RNG stream cannot be reproduced bit-exactly; the
    # kernel implements equivalent p=0.5 inverted dropout with the hardware PRNG.
    if jax.default_backend() == "tpu":
        params_train = hne_prepare_params(w1, b1, w2, b2,
                                          compute_dtype=jnp.bfloat16, training=True)
        out_train = jax.block_until_ready(
            hne_forward(x, params_train, training=True, seed=123))
        assert out_train.shape == (batch, output_dim)

    print("KERNEL_OK")
</pallas_src>

<mosaic_0001>
module attributes {stable_mosaic.version = 11 : i64} {
  func.func @hne_kernel(%arg0: i32, %arg1: memref<1xi32, #tpu.memory_space<smem>>, %arg2: memref<16x32xf32, #tpu.memory_space<vmem>>, %arg3: memref<32x128xf32, #tpu.memory_space<vmem>>, %arg4: memref<1x128xf32, #tpu.memory_space<vmem>>, %arg5: memref<128x128xf32, #tpu.memory_space<vmem>>, %arg6: memref<1x128xf32, #tpu.memory_space<vmem>>, %arg7: memref<16x128xf32, #tpu.memory_space<vmem>>) attributes {dimension_semantics = [#tpu.dimension_semantics<parallel>], iteration_bounds = array<i64: 1>, scalar_prefetch = 1 : i64, scratch_operands = 0 : i64, tpu.core_type = #tpu.core_type<tc>, window_params = [{transform_indices = @transform_0, window_bounds = array<i64: 16, 32>}, {pipeline_mode = #tpu.pipeline_mode<synchronous>, transform_indices = @transform_1, window_bounds = array<i64: 32, 128>}, {pipeline_mode = #tpu.pipeline_mode<synchronous>, transform_indices = @transform_2, window_bounds = array<i64: 1, 128>}, {pipeline_mode = #tpu.pipeline_mode<synchronous>, transform_indices = @transform_3, window_bounds = array<i64: 128, 128>}, {pipeline_mode = #tpu.pipeline_mode<synchronous>, transform_indices = @transform_4, window_bounds = array<i64: 1, 128>}, {transform_indices = @transform_5, window_bounds = array<i64: 16, 128>}]} {
    %c0 = arith.constant 0 : index
    %c0_0 = arith.constant 0 : index
    %0 = vector.load %arg2[%c0, %c0_0] : memref<16x32xf32, #tpu.memory_space<vmem>>, vector<16x32xf32>
    %c0_1 = arith.constant 0 : index
    %c0_2 = arith.constant 0 : index
    %1 = vector.load %arg3[%c0_1, %c0_2] : memref<32x128xf32, #tpu.memory_space<vmem>>, vector<32x128xf32>
    %cst = arith.constant dense<0.000000e+00> : vector<16x128xf32>
    %2 = tpu.matmul %0, %1, %cst {dimension_numbers = #tpu.dot_dimension_numbers<[1], [0], [0], [1], [0, 0, 1, 1], [], []>} : vector<16x32xf32>, vector<32x128xf32>, vector<16x128xf32> -> vector<16x128xf32>
    %c0_3 = arith.constant 0 : index
    %c0_4 = arith.constant 0 : index
    %3 = vector.load %arg4[%c0_3, %c0_4] : memref<1x128xf32, #tpu.memory_space<vmem>>, vector<1x128xf32>
    %4 = vector.broadcast %3 : vector<1x128xf32> to vector<16x128xf32>
    %5 = arith.addf %2, %4 : vector<16x128xf32>
    %cst_5 = arith.constant 0.000000e+00 : f32
    %6 = vector.broadcast %cst_5 : f32 to vector<16x128xf32>
    %7 = arith.cmpf ogt, %5, %6 : vector<16x128xf32>
    %cst_6 = arith.constant 0.00999999977 : f32
    %8 = vector.broadcast %cst_6 : f32 to vector<16x128xf32>
    %9 = arith.mulf %8, %5 : vector<16x128xf32>
    %10 = arith.select %7, %5, %9 : vector<16x128xi1>, vector<16x128xf32>
    %c0_7 = arith.constant 0 : index
    %c0_8 = arith.constant 0 : index
    %11 = vector.load %arg5[%c0_7, %c0_8] : memref<128x128xf32, #tpu.memory_space<vmem>>, vector<128x128xf32>
    %cst_9 = arith.constant dense<0.000000e+00> : vector<16x128xf32>
    %12 = tpu.matmul %10, %11, %cst_9 {dimension_numbers = #tpu.dot_dimension_numbers<[1], [0], [0], [1], [0, 0, 1, 1], [], []>} : vector<16x128xf32>, vector<128x128xf32>, vector<16x128xf32> -> vector<16x128xf32>
    %c0_10 = arith.constant 0 : index
    %c0_11 = arith.constant 0 : index
    %13 = vector.load %arg6[%c0_10, %c0_11] : memref<1x128xf32, #tpu.memory_space<vmem>>, vector<1x128xf32>
    %14 = vector.broadcast %13 : vector<1x128xf32> to vector<16x128xf32>
    %15 = arith.addf %12, %14 : vector<16x128xf32>
    %cst_12 = arith.constant 0.000000e+00 : f32
    %16 = vector.broadcast %cst_12 : f32 to vector<16x128xf32>
    %17 = arith.cmpf ogt, %15, %16 : vector<16x128xf32>
    %cst_13 = arith.constant 0.00999999977 : f32
    %18 = vector.broadcast %cst_13 : f32 to vector<16x128xf32>
    %19 = arith.mulf %18, %15 : vector<16x128xf32>
    %20 = arith.select %17, %15, %19 : vector<16x128xi1>, vector<16x128xf32>
    %c0_14 = arith.constant 0 : index
    %c0_15 = arith.constant 0 : index
    %21 = vector.load %arg7[%c0_14, %c0_15] : memref<16x128xf32, #tpu.memory_space<vmem>>, vector<16x128xf32>
    tpu.vector_store %arg7[%c0_14, %c0_15], %20 {strides = array<i32>} : memref<16x128xf32, #tpu.memory_space<vmem>>, vector<16x128xf32>,
    return
  }
  func.func @transform_0(%arg0: i32, %arg1: memref<1xi32, #tpu.memory_space<smem>>) -> (i32, i32) {
    %c0_i32 = arith.constant 0 : i32
    %c0_i32_0 = arith.constant 0 : i32
    return %arg0, %c0_i32 : i32, i32
  }
  func.func @transform_1(%arg0: i32, %arg1: memref<1xi32, #tpu.memory_space<smem>>) -> (i32, i32) {
    %c0_i32 = arith.constant 0 : i32
    %c0_i32_0 = arith.constant 0 : i32
    %c0_i32_1 = arith.constant 0 : i32
    return %c0_i32, %c0_i32_0 : i32, i32
  }
  func.func @transform_2(%arg0: i32, %arg1: memref<1xi32, #tpu.memory_space<smem>>) -> (i32, i32) {
    %c0_i32 = arith.constant 0 : i32
    %c0_i32_0 = arith.constant 0 : i32
    %c0_i32_1 = arith.constant 0 : i32
    return %c0_i32, %c0_i32_0 : i32, i32
  }
  func.func @transform_3(%arg0: i32, %arg1: memref<1xi32, #tpu.memory_space<smem>>) -> (i32, i32) {
    %c0_i32 = arith.constant 0 : i32
    %c0_i32_0 = arith.constant 0 : i32
    %c0_i32_1 = arith.constant 0 : i32
    return %c0_i32, %c0_i32_0 : i32, i32
  }
  func.func @transform_4(%arg0: i32, %arg1: memref<1xi32, #tpu.memory_space<smem>>) -> (i32, i32) {
    %c0_i32 = arith.constant 0 : i32
    %c0_i32_0 = arith.constant 0 : i32
    %c0_i32_1 = arith.constant 0 : i32
    return %c0_i32, %c0_i32_0 : i32, i32
  }
  func.func @transform_5(%arg0: i32, %arg1: memref<1xi32, #tpu.memory_space<smem>>) -> (i32, i32) {
    %c0_i32 = arith.constant 0 : i32
    %c0_i32_0 = arith.constant 0 : i32
    return %arg0, %c0_i32 : i32, i32
  }
}

</mosaic_0001>

<llo_original>
// kernel: tpu_custom_call.1
$region0: #{tpu_custom_call.1}
  #allocation0 [shape = 'u32[]', space=smem, size = 0x4, offset = 0x4, fixed_abs, tag = 'smem constant byte address 0x4 - core index']
  #allocation1 [shape = 'u32[144,128]{1,0:T(1,128)}', space=vmem, size = 0x12000, scoped, tag = 'internal scratch']
  #allocation2 [shape = 's32[1]{0}', space=sflag, size = 0x4, scoped, tag = 'scoped memory for tpu_custom_call.1']
  #allocation3 [shape = 's32[1]{0:T(128)S(6)}', space=smem, size = 0x200, scoped, tag = 'prefetched SMEM operand 0']
  %s0 = inlined_call_operand.<no memory space> [shape: s32[1], index: 0, kind: input, shape index: {}]
  %s1 = inlined_call_operand.hbm [shape: f32[8,32], index: 1, kind: input, shape index: {}]
  %s2 = inlined_call_operand.hbm [shape: f32[32,128], index: 2, kind: input, shape index: {}]
  %s3 = inlined_call_operand.vmem [shape: f32[1,128], index: 3, kind: input, shape index: {}]
  %s4 = inlined_call_operand.hbm [shape: f32[128,128], index: 4, kind: input, shape index: {}]
  %s5 = inlined_call_operand.vmem [shape: f32[1,128], index: 5, kind: input, shape index: {}]
  %s6 = inlined_call_operand.hbm [shape: f32[8,128], index: 6, kind: output, shape index: {}]
  %s7 = sld [smem:[#allocation0]]
  $region42: #{tpu_custom_call.1} parent=0
    _
  %s9 = ssub.s32 1, %s7
  %s10 = scalar_select 0, %s9, %s7
  %11 = sst [smem:[#allocation3]] %s0
  $region1: #{tpu_custom_call.1} parent=0
    #allocation4 [shape = 'u8[8192]{0}', space=vmem, size = 0x2000, scoped, tag = 'input window, operand 1, single buffered']
    #allocation5 [shape = 's32[1]{0}', space=sflag, size = 0x4, scoped, tag = 'scoped memory for tpu_custom_call.1']
    #allocation6 [shape = 's32[1]{0}', space=sflag, size = 0x4, scoped, tag = 'scoped memory for tpu_custom_call.1']
    #allocation7 [shape = 'u8[16384]{0}', space=vmem, size = 0x4000, scoped, tag = 'input window, operand 2, single buffered']
    #allocation8 [shape = 's32[1]{0}', space=sflag, size = 0x4, scoped, tag = 'scoped memory for tpu_custom_call.1']
    #allocation9 [shape = 'u8[65536]{0}', space=vmem, size = 0x10000, scoped, tag = 'input window, operand 4, single buffered']
    #allocation10 [shape = 'u8[8192]{0}', space=vmem, size = 0x2000, scoped, tag = 'output window, operand 0, single buffered']
    %12 = vsyncpa [#allocation5], 0
    %13 = vsyncpa [#allocation8], 0
    %14 = vsyncpa [#allocation6], 0
    // Predicated region
    $region2: #{tpu_custom_call.1} parent=1 // pred_check
      _
    $region3: #{tpu_custom_call.1} parent=1 // pred_check_branch
      %16 = sbr.rel (0) target = $region5
    $region4: #{tpu_custom_call.1} parent=1 // pred_region
      %s18 = ssub.s32 256, 128
      %19 = vsyncadd [#allocation5], %s18
      %s20 = sshll.u32 [#allocation4], 4
      %s21 = int_to_ptr.vmem [resolvable:$true] %s20
      %26 = dma.hbm_to_vmem [thread:$0]  %s1, 128, %s21, [#allocation5], 128, 128, 8
    $region5: #{tpu_custom_call.1} parent=1 // pred_fallthru
      _
    // Predicated region
    $region6: #{tpu_custom_call.1} parent=1 // pred_check
      _
    $region7: #{tpu_custom_call.1} parent=1 // pred_check_branch
      %28 = sbr.rel (0) target = $region9
    $region8: #{tpu_custom_call.1} parent=1 // pred_region
      %s30 = ssub.s32 512, 512
      %31 = vsyncadd [#allocation8], %s30
      %s32 = sshll.u32 [#allocation7], 4
      %s33 = int_to_ptr.vmem [resolvable:$true] %s32
      %38 = dma.hbm_to_vmem [thread:$0]  %s2, 512, %s33, [#allocation8], 128, 128, 8
    $region9: #{tpu_custom_call.1} parent=1 // pred_fallthru
      _
    // Predicated region
    $region10: #{tpu_custom_call.1} parent=1 // pred_check
      _
    $region11: #{tpu_custom_call.1} parent=1 // pred_check_branch
      %40 = sbr.rel (0) target = $region13
    $region12: #{tpu_custom_call.1} parent=1 // pred_region
      _
    $region13: #{tpu_custom_call.1} parent=1 // pred_fallthru
      _
    // Predicated region
    $region14: #{tpu_custom_call.1} parent=1 // pred_check
      _
    $region15: #{tpu_custom_call.1} parent=1 // pred_check_branch
      %42 = sbr.rel (0) target = $region17
    $region16: #{tpu_custom_call.1} parent=1 // pred_region
      %s44 = ssub.s32 2048, 2048
      %45 = vsyncadd [#allocation8], %s44
      %s46 = sshll.u32 [#allocation9], 4
      %s47 = int_to_ptr.vmem [resolvable:$true] %s46
      %52 = dma.hbm_to_vmem [thread:$0]  %s4, 2048, %s47, [#allocation8], 128, 128, 8
    $region17: #{tpu_custom_call.1} parent=1 // pred_fallthru
      _
    // Predicated region
    $region18: #{tpu_custom_call.1} parent=1 // pred_check
      _
    $region19: #{tpu_custom_call.1} parent=1 // pred_check_branch
      %54 = sbr.rel (0) target = $region21
    $region20: #{tpu_custom_call.1} parent=1 // pred_region
      _
    $region21: #{tpu_custom_call.1} parent=1 // pred_fallthru
      _
    // Predicated region
    $region22: #{tpu_custom_call.1} parent=1 // pred_check
      _
    $region23: #{tpu_custom_call.1} parent=1 // pred_check_branch
      %56 = sbr.rel (0) target = $region25
    $region24: #{tpu_custom_call.1} parent=1 // pred_region
      %57 = dma.done [#allocation5], 256
    $region25: #{tpu_custom_call.1} parent=1 // pred_fallthru
      _
    // Predicated region
    $region26: #{tpu_custom_call.1} parent=1 // pred_check
      _
    $region27: #{tpu_custom_call.1} parent=1 // pred_check_branch
      %59 = sbr.rel (0) target = $region29
    $region28: #{tpu_custom_call.1} parent=1 // pred_region
      %60 = dma.done [#allocation8], 512
    $region29: #{tpu_custom_call.1} parent=1 // pred_fallthru
      _
    // Predicated region
    $region30: #{tpu_custom_call.1} parent=1 // pred_check
      _
    $region31: #{tpu_custom_call.1} parent=1 // pred_check_branch
      %62 = sbr.rel (0) target = $region33
    $region32: #{tpu_custom_call.1} parent=1 // pred_region
      %63 = dma.done [#allocation8], 2048
    $region33: #{tpu_custom_call.1} parent=1 // pred_fallthru
      _
    %v64 = vld [vmem:[#allocation4] sm:$0xff]
    %v65 = vld [vmem:[#allocation4 + $0x8] sm:$0xff]
    %v66 = vld [vmem:[#allocation7] sm:$0xff]
    %v67 = vld [vmem:[#allocation7 + $0x8] sm:$0xff]
    %v68 = vld [vmem:[#allocation7 + $0x10] sm:$0xff]
    %v69 = vld [vmem:[#allocation7 + $0x18] sm:$0xff]
    %v70 = vld [vmem:[%s3] sm:$0x1]
    %v72 = vlaneseq
    %v73 = vshrl.u32 %v72, 7
    %v74 = vsub.s32 0, %v73
    %v75 = vrot.slane %v70, %v74
    %vm77 = vcmask 261120
    %v79 = vsel %vm77, %v64, 0
    %v82 = vsel %vm77, %v65, 0
    %84 = vmatprep.subr.mxu0 0.0
    %85 = vmatpush1.msra.mxu0 %v66
    %86 = vmatprep.subr.mxu0 0.0
    %87 = vmatpush1.msra.mxu0 %v67
    %88 = vmatprep.subr.mxu0 0.0
    %89 = vmatpush1.msra.mxu0 %v68
    %90 = vmatprep.subr.mxu0 0.0
    %91 = vmatpush1.msra.mxu0 %v69
    %92 = vmatprep.subr.mxu0 0.0
    %93 = vmatpush1.msra.mxu0 0.0
    %94 = vmatprep.subr.mxu0 0.0
    %95 = vmatpush1.msra.mxu0 0.0
    %96 = vmatprep.subr.mxu0 0.0
    %97 = vmatpush1.msra.mxu0 0.0
    %98 = vmatprep.subr.mxu0 0.0
    %99 = vmatpush1.msra.mxu0 0.0
    %100 = vmatprep.subr.mxu0 0.0
    %101 = vmatpush1.msra.mxu0 0.0
    %102 = vmatprep.subr.mxu0 0.0
    %103 = vmatpush1.msra.mxu0 0.0
    %104 = vmatprep.subr.mxu0 0.0
    %105 = vmatpush1.msra.mxu0 0.0
    %106 = vmatprep.subr.mxu0 0.0
    %107 = vmatpush1.msra.mxu0 0.0
    %108 = vmatprep.subr.mxu0 0.0
    %109 = vmatpush1.msra.mxu0 0.0
    %110 = vmatprep.subr.mxu0 0.0
    %111 = vmatpush1.msra.mxu0 0.0
    %112 = vmatprep.subr.mxu0 0.0
    %113 = vmatpush1.msra.mxu0 0.0
    %114 = vmatprep.subr.mxu0 0.0
    %115 = vmatpush1.msra.mxu0 0.0
    %116 = vmatprep.subr.mxu0 0.0
    %117 = vmatpush1.msra.mxu0 0.0
    %118 = vmatprep.subr.mxu0 0.0
    %119 = vmatpush1.msra.mxu0 0.0
    %120 = vmatprep.subr.mxu0 0.0
    %121 = vmatpush1.msra.mxu0 0.0
    %122 = vmatprep.subr.mxu0 0.0
    %123 = vmatpush1.msra.mxu0 0.0
    %124 = vmatprep.subr.mxu0 0.0
    %125 = vmatpush1.msra.mxu0 0.0
    %126 = vmatprep.subr.mxu0 0.0
    %127 = vmatpush1.msra.mxu0 0.0
    %128 = vmatprep.subr.mxu0 0.0
    %129 = vmatpush1.msra.mxu0 0.0
    %130 = vmatprep.subr.mxu0 0.0
    %131 = vmatpush1.msra.mxu0 0.0
    %132 = vmatprep.subr.mxu0 0.0
    %133 = vmatpush1.msra.mxu0 0.0
    %134 = vmatprep.subr.mxu0 0.0
    %135 = vmatpush1.msra.mxu0 0.0
    %136 = vmatprep.subr.mxu0 0.0
    %137 = vmatpush1.msra.mxu0 0.0
    %138 = vmatprep.subr.mxu0 0.0
    %139 = vmatpush1.msra.mxu0 0.0
    %140 = vmatprep.subr.mxu0 0.0
    %141 = vmatpush1.msra.mxu0 0.0
    %142 = vmatprep.subr.mxu0 0.0
    %143 = vmatpush1.msra.mxu0 0.0
    %144 = vmatprep.subr.mxu0 0.0
    %145 = vmatpush1.msra.mxu0 0.0
    %146 = vmatprep.subr.mxu0 0.0
    %147 = vmatpush1.msra.mxu0 0.0
    %148 = vmatprep.mubr.f32.mxu0 0.0
    %149 = vmatmul.mubr.f32.gmra.mrb[0].mxu0 %v79
    %v150 = vpop.f32.mrb[0].mxu0
    %v151 = vadd.f32 %v75, %v150
    %v152 = vpop.f32.mrb[0].mxu0
    %153 = vmatprep.mubr.f32.mxu0 0.0
    %154 = vmatmul.mubr.f32.gmra.mrb[0].mxu0 %v82
    %v155 = vpop.f32.mrb[0].mxu0
    %v156 = vadd.f32 %v75, %v155
    %v157 = vpop.f32.mrb[0].mxu0
    %158 = vdwg.mxu0
    %vm159 = vcmp.gt.f32.partialorder %v151, 0.0
    %vm160 = vcmp.gt.f32.partialorder %v156, 0.0
    %v161 = vmul.f32 %v151, 0.01
    %v162 = vmul.f32 %v156, 0.01
    %v163 = vsel %vm159, %v151, %v161
    %v164 = vsel %vm160, %v156, %v162
    %v165 = vld [vmem:[#allocation9] sm:$0xff]
    %v166 = vld [vmem:[#allocation9 + $0x8] sm:$0xff]
    %v167 = vld [vmem:[#allocation9 + $0x10] sm:$0xff]
    %v168 = vld [vmem:[#allocation9 + $0x18] sm:$0xff]
    %v169 = vld [vmem:[#allocation9 + $0x20] sm:$0xff]
    %v170 = vld [vmem:[#allocation9 + $0x28] sm:$0xff]
    %v171 = vld [vmem:[#allocation9 + $0x30] sm:$0xff]
    %v172 = vld [vmem:[#allocation9 + $0x38] sm:$0xff]
    %v173 = vld [vmem:[#allocation9 + $0x40] sm:$0xff]
    %v174 = vld [vmem:[#allocation9 + $0x48] sm:$0xff]
    %v175 = vld [vmem:[#allocation9 + $0x50] sm:$0xff]
    %v176 = vld [vmem:[#allocation9 + $0x58] sm:$0xff]
    %v177 = vld [vmem:[#allocation9 + $0x60] sm:$0xff]
    %v178 = vld [vmem:[#allocation9 + $0x68] sm:$0xff]
    %v179 = vld [vmem:[#allocation9 + $0x70] sm:$0xff]
    %v180 = vld [vmem:[#allocation9 + $0x78] sm:$0xff]
    %v181 = vld [vmem:[%s5] sm:$0x1]
    %v183 = vlaneseq
    %v184 = vshrl.u32 %v183, 7
    %v185 = vsub.s32 0, %v184
    %v186 = vrot.slane %v181, %v185
    %188 = vmatprep.subr.mxu0 0.0
    %189 = vmatpush1.msra.mxu0 %v165
    %190 = vmatprep.subr.mxu0 0.0
    %191 = vmatpush1.msra.mxu0 %v166
    %192 = vmatprep.subr.mxu0 0.0
    %193 = vmatpush1.msra.mxu0 %v167
    %194 = vmatprep.subr.mxu0 0.0
    %195 = vmatpush1.msra.mxu0 %v168
    %196 = vmatprep.subr.mxu0 0.0
    %197 = vmatpush1.msra.mxu0 %v169
    %198 = vmatprep.subr.mxu0 0.0
    %199 = vmatpush1.msra.mxu0 %v170
    %200 = vmatprep.subr.mxu0 0.0
    %201 = vmatpush1.msra.mxu0 %v171
    %202 = vmatprep.subr.mxu0 0.0
    %203 = vmatpush1.msra.mxu0 %v172
    %204 = vmatprep.subr.mxu0 0.0
    %205 = vmatpush1.msra.mxu0 %v173
    %206 = vmatprep.subr.mxu0 0.0
    %207 = vmatpush1.msra.mxu0 %v174
    %208 = vmatprep.subr.mxu0 0.0
    %209 = vmatpush1.msra.mxu0 %v175
    %210 = vmatprep.subr.mxu0 0.0
    %211 = vmatpush1.msra.mxu0 %v176
    %212 = vmatprep.subr.mxu0 0.0
    %213 = vmatpush1.msra.mxu0 %v177
    %214 = vmatprep.subr.mxu0 0.0
    %215 = vmatpush1.msra.mxu0 %v178
    %216 = vmatprep.subr.mxu0 0.0
    %217 = vmatpush1.msra.mxu0 %v179
    %218 = vmatprep.subr.mxu0 0.0
    %219 = vmatpush1.msra.mxu0 %v180
    %220 = vmatprep.subr.mxu0 0.0
    %221 = vmatpush1.msra.mxu0 0.0
    %222 = vmatprep.subr.mxu0 0.0
    %223 = vmatpush1.msra.mxu0 0.0
    %224 = vmatprep.subr.mxu0 0.0
    %225 = vmatpush1.msra.mxu0 0.0
    %226 = vmatprep.subr.mxu0 0.0
    %227 = vmatpush1.msra.mxu0 0.0
    %228 = vmatprep.subr.mxu0 0.0
    %229 = vmatpush1.msra.mxu0 0.0
    %230 = vmatprep.subr.mxu0 0.0
    %231 = vmatpush1.msra.mxu0 0.0
    %232 = vmatprep.subr.mxu0 0.0
    %233 = vmatpush1.msra.mxu0 0.0
    %234 = vmatprep.subr.mxu0 0.0
    %235 = vmatpush1.msra.mxu0 0.0
    %236 = vmatprep.subr.mxu0 0.0
    %237 = vmatpush1.msra.mxu0 0.0
    %238 = vmatprep.subr.mxu0 0.0
    %239 = vmatpush1.msra.mxu0 0.0
    %240 = vmatprep.subr.mxu0 0.0
    %241 = vmatpush1.msra.mxu0 0.0
    %242 = vmatprep.subr.mxu0 0.0
    %243 = vmatpush1.msra.mxu0 0.0
    %244 = vmatprep.subr.mxu0 0.0
    %245 = vmatpush1.msra.mxu0 0.0
    %246 = vmatprep.subr.mxu0 0.0
    %247 = vmatpush1.msra.mxu0 0.0
    %248 = vmatprep.subr.mxu0 0.0
    %249 = vmatpush1.msra.mxu0 0.0
    %250 = vmatprep.subr.mxu0 0.0
    %251 = vmatpush1.msra.mxu0 0.0
    %252 = vmatprep.mubr.f32.mxu0 0.0
    %253 = vmatmul.mubr.f32.gmra.mrb[0].mxu0 %v163
    %v254 = vpop.f32.mrb[0].mxu0
    %v255 = vadd.f32 %v186, %v254
    %v256 = vpop.f32.mrb[0].mxu0
    %257 = vmatprep.mubr.f32.mxu0 0.0
    %258 = vmatmul.mubr.f32.gmra.mrb[0].mxu0 %v164
    %v259 = vpop.f32.mrb[0].mxu0
    %v260 = vadd.f32 %v186, %v259
    %v261 = vpop.f32.mrb[0].mxu0
    %262 = vdwg.mxu0
    %vm263 = vcmp.gt.f32.partialorder %v255, 0.0
    %vm264 = vcmp.gt.f32.partialorder %v260, 0.0
    %v265 = vmul.f32 %v255, 0.01
    %v266 = vmul.f32 %v260, 0.01
    %v267 = vsel %vm263, %v255, %v265
    %v268 = vsel %vm264, %v260, %v266
    %269 = vst [vmem:[#allocation10] sm:$0xff] %v267
    %270 = vst [vmem:[#allocation10 + $0x8] sm:$0xff] %v268
    // Predicated region
    $region34: #{tpu_custom_call.1} parent=1 // pred_check
      _
    $region35: #{tpu_custom_call.1} parent=1 // pred_check_branch
      %272 = sbr.rel (0) target = $region37
    $region36: #{tpu_custom_call.1} parent=1 // pred_region
      %s274 = ssub.s32 256, 128
      %275 = vsyncadd [#allocation6], %s274
      %s276 = sshll.u32 [#allocation10], 4
      %s277 = int_to_ptr.vmem [resolvable:$true] %s276
      %282 = dma.vmem_to_hbm [thread:$0]  %s277, 128, %s6, [#allocation6], 128, 128, 8
    $region37: #{tpu_custom_call.1} parent=1 // pred_fallthru
      _
    // Predicated region
    $region38: #{tpu_custom_call.1} parent=1 // pred_check
      _
    $region39: #{tpu_custom_call.1} parent=1 // pred_check_branch
      %284 = sbr.rel (0) target = $region41
    $region40: #{tpu_custom_call.1} parent=1 // pred_region
      %285 = dma.done [#allocation6], 256
    $region41: #{tpu_custom_call.1} parent=1 // pred_fallthru
      _
    %286 = vsyncpa [#allocation5], 1
    %287 = vsyncpa [#allocation8], 1
    %288 = vsyncpa [#allocation6], 1

</llo_original>
